<compile_context>
chip_gen: v6e
topology: v6e:2x2x1
jax: 0.10.0
libtpu: 0.0.40
codegen_flags: <defaults>
</compile_context>

<pallas_src>
import functools
import math

import jax
import jax.numpy as jnp
from jax.experimental import pallas as pl
from jax.experimental.pallas import tpu as pltpu


# ----------------------------- kernel ------------------------------------- #

def mhsa_kernel(x_ref,      # (1, N, E)   f32
                wq_ref,     # (1, E, D)   bf16   (per-head slab, selected by grid)
                wk_ref,     # (1, E, D)   bf16
                wv_ref,     # (1, E, D)   bf16
                wp_ref,     # (1, D, E)   bf16   (per-head projection slab)
                bp_ref,     # (1, E)      f32
                out_ref,    # (1, N, E)   f32    (accumulated across the head axis)
                attn_ref,   # (1, 1, N, N) f32
                *,
                scale: float):
    head = pl.program_id(1)
    n_seq = out_ref.shape[1]
    e_dim = out_ref.shape[2]

    x = x_ref[0].astype(jnp.bfloat16)                                  # (N, E)

    # Per-head Q/K/V: bf16 MXU inputs, f32 accumulation.
    q = jnp.dot(x, wq_ref[0], preferred_element_type=jnp.float32)      # (N, D)
    k = jnp.dot(x, wk_ref[0], preferred_element_type=jnp.float32)      # (N, D)
    v = jnp.dot(x, wv_ref[0], preferred_element_type=jnp.float32)      # (N, D)

    # Scores: q @ k^T via dot_general (contract last dims; no explicit transpose).
    dots = jax.lax.dot_general(
        q.astype(jnp.bfloat16), k.astype(jnp.bfloat16),
        dimension_numbers=(((1,), (1,)), ((), ())),
        preferred_element_type=jnp.float32) * scale                    # (N, N)

    # Numerically stable softmax in f32; approx reciprocal runs on the EUP.
    dots = dots - jnp.max(dots, axis=-1, keepdims=True)
    p = jnp.exp(dots)
    p = p * pl.reciprocal(jnp.sum(p, axis=-1, keepdims=True), approx=True)
    attn_ref[0, 0] = p

    # attn @ v, then this head's slice of the output projection.
    o = jnp.dot(p.astype(jnp.bfloat16), v.astype(jnp.bfloat16),
                preferred_element_type=jnp.float32)                    # (N, D)
    contrib = jnp.dot(o.astype(jnp.bfloat16), wp_ref[0],
                      preferred_element_type=jnp.float32)              # (N, E)

    # Accumulate the projection across the head grid axis directly in out_ref
    # (block index is constant in `head`, so the block stays resident in VMEM).
    @pl.when(head == 0)
    def _():
        out_ref[0] = jnp.broadcast_to(bp_ref[...], (n_seq, e_dim))     # bias init

    out_ref[0] = out_ref[0] + contrib
    # nn.Dropout(p=0.0) is an identity -> nothing to do.


# ----------------------------- wrapper ------------------------------------ #

def multi_head_self_attention(x, kparams, *, num_heads, head_size):
    B, N, E = x.shape
    H, D = num_heads, head_size

    kernel = functools.partial(mhsa_kernel, scale=1.0 / math.sqrt(D))

    # Size the scoped VMEM limit from the actual block footprint
    # (x4 for double-buffering of inputs/outputs plus generous slack).
    blk_bytes = (N * E * 4            # x block
                 + 3 * E * D * 2      # wq / wk / wv (bf16)
                 + D * E * 2          # wp (bf16)
                 + E * 4              # bias
                 + N * E * 4          # out block
                 + N * N * 4)         # attn block
    vmem_limit = int(min(max(4 * blk_bytes + (2 << 20), 8 << 20), 32 << 20))

    out, attn = pl.pallas_call(
        kernel,
        grid=(B, H),
        in_specs=[
            pl.BlockSpec((1, N, E), lambda b, h: (b, 0, 0)),   # x (same block for all heads)
            pl.BlockSpec((1, E, D), lambda b, h: (h, 0, 0)),   # wq per head
            pl.BlockSpec((1, E, D), lambda b, h: (h, 0, 0)),   # wk per head
            pl.BlockSpec((1, E, D), lambda b, h: (h, 0, 0)),   # wv per head
            pl.BlockSpec((1, D, E), lambda b, h: (h, 0, 0)),   # wprj per head
            pl.BlockSpec((1, E), lambda b, h: (0, 0)),         # bias
        ],
        out_specs=[
            pl.BlockSpec((1, N, E), lambda b, h: (b, 0, 0)),        # out (accumulator over h)
            pl.BlockSpec((1, 1, N, N), lambda b, h: (b, h, 0, 0)),  # attn maps
        ],
        out_shape=[
            jax.ShapeDtypeStruct((B, N, E), jnp.float32),
            jax.ShapeDtypeStruct((B, H, N, N), jnp.float32),
        ],
        compiler_params=pltpu.CompilerParams(
            dimension_semantics=("parallel", "arbitrary"),
            vmem_limit_bytes=vmem_limit,
        ),
    )(x, kparams["wq"], kparams["wk"], kparams["wv"], kparams["wp"], kparams["bp"])
    return out, attn


# ------------------------------ params ------------------------------------- #

def init_params(key, embedding_dim, num_heads, head_size):
    """Parameters in the PyTorch module's native layout."""
    E, H, D = embedding_dim, num_heads, head_size
    HD = H * D
    k_qkv, k_prj, k_b = jax.random.split(key, 3)
    stdv_qkv = 1.0 / math.sqrt(D)
    stdv_prj = 1.0 / math.sqrt(E)
    return {
        "w_qkv": jax.random.uniform(k_qkv, (3 * HD, E), jnp.float32,
                                    -stdv_qkv, stdv_qkv),        # qkv.weight
        "w_prj": jax.random.uniform(k_prj, (E, HD), jnp.float32,
                                    -stdv_prj, stdv_prj),        # prj.weight
        # reset_parameters() zeroes prj.bias; use a random one here to exercise
        # the bias path (forward semantics are identical for any bias value).
        "b_prj": jax.random.uniform(k_b, (E,), jnp.float32,
                                    -stdv_prj, stdv_prj),
    }


def prep_kernel_params(p, num_heads, head_size):
    """Re-layout PyTorch weights into per-head bf16 slabs for the kernel."""
    H, D = num_heads, head_size
    E = p["w_qkv"].shape[1]
    # x @ Wqkv.T has its 3*H*D columns ordered (S, H, D) per the module's rearrange.
    w_t = p["w_qkv"].T.reshape(E, 3, H, D).transpose(1, 2, 0, 3)      # (3, H, E, D)
    wq = w_t[0].astype(jnp.bfloat16)
    wk = w_t[1].astype(jnp.bfloat16)
    wv = w_t[2].astype(jnp.bfloat16)
    wp = p["w_prj"].T.reshape(H, D, E).astype(jnp.bfloat16)           # (H, D, E)
    bp = p["b_prj"].reshape(1, E).astype(jnp.float32)
    return {"wq": wq, "wk": wk, "wv": wv, "wp": wp, "bp": bp}


# -------------------------- pure-JAX reference ----------------------------- #

def ref_mhsa(x, p, num_heads, head_size):
    """Reference matching the module, with the same bf16 matmul-input casts."""
    B, N, E = x.shape
    H, D = num_heads, head_size
    bf = lambda a: a.astype(jnp.bfloat16)

    qkv = jnp.einsum("bne,fe->bnf", bf(x), bf(p["w_qkv"]),
                     preferred_element_type=jnp.float32)              # (B, N, 3HD)
    qkv = qkv.reshape(B, N, 3, H, D).transpose(2, 0, 3, 1, 4)         # (3, B, H, N, D)
    q, k, v = qkv[0], qkv[1], qkv[2]
    dots = jnp.einsum("bhnd,bhmd->bhnm", bf(q), bf(k),
                      preferred_element_type=jnp.float32) / math.sqrt(D)
    attn = jax.nn.softmax(dots, axis=-1)
    o = jnp.einsum("bhnm,bhmd->bhnd", bf(attn), bf(v),
                   preferred_element_type=jnp.float32)
    o = o.transpose(0, 2, 1, 3).reshape(B, N, H * D)
    out = jnp.einsum("bnf,ef->bne", bf(o), bf(p["w_prj"]),
                     preferred_element_type=jnp.float32) + p["b_prj"]
    return out, attn


# ------------------------------- main --------------------------------------- #

if __name__ == "__main__":
    B, N = 2, 8                 # batch, sequence length
    E, H = 32, 4                # embedding_dim, num_attention_heads
    D = E // H                  # head_size

    key = jax.random.PRNGKey(0)
    kx, kp = jax.random.split(key)
    x = jax.random.normal(kx, (B, N, E), jnp.float32)

    params = init_params(kp, E, H, D)
    kparams = prep_kernel_params(params, H, D)

    out, attn = multi_head_self_attention(x, kparams, num_heads=H, head_size=D)
    out = jax.block_until_ready(out)
    attn = jax.block_until_ready(attn)

    ref_out, ref_attn = ref_mhsa(x, params, H, D)

    assert out.shape == (B, N, E)
    assert attn.shape == (B, H, N, N)
    assert jnp.allclose(out, ref_out, rtol=2e-2, atol=2e-2), \
        float(jnp.max(jnp.abs(out - ref_out)))
    assert jnp.allclose(attn, ref_attn, rtol=2e-2, atol=2e-2), \
        float(jnp.max(jnp.abs(attn - ref_attn)))

    print("KERNEL_OK")
</pallas_src>

<mosaic_0001>
module attributes {stable_mosaic.version = 11 : i64} {
  func.func @mhsa_kernel(%arg0: i32, %arg1: i32, %arg2: memref<1x8x32xf32, #tpu.memory_space<vmem>>, %arg3: memref<1x32x8xbf16, #tpu.memory_space<vmem>>, %arg4: memref<1x32x8xbf16, #tpu.memory_space<vmem>>, %arg5: memref<1x32x8xbf16, #tpu.memory_space<vmem>>, %arg6: memref<1x8x32xbf16, #tpu.memory_space<vmem>>, %arg7: memref<1x32xf32, #tpu.memory_space<vmem>>, %arg8: memref<1x8x32xf32, #tpu.memory_space<vmem>>, %arg9: memref<1x1x8x8xf32, #tpu.memory_space<vmem>>) attributes {dimension_semantics = [#tpu.dimension_semantics<parallel>, #tpu.dimension_semantics<arbitrary>], iteration_bounds = array<i64: 2, 4>, scalar_prefetch = 0 : i64, scratch_operands = 0 : i64, tpu.core_type = #tpu.core_type<tc>, window_params = [{transform_indices = @transform_0, window_bounds = array<i64: 1, 8, 32>}, {transform_indices = @transform_1, window_bounds = array<i64: 1, 32, 8>}, {transform_indices = @transform_2, window_bounds = array<i64: 1, 32, 8>}, {transform_indices = @transform_3, window_bounds = array<i64: 1, 32, 8>}, {transform_indices = @transform_4, window_bounds = array<i64: 1, 8, 32>}, {pipeline_mode = #tpu.pipeline_mode<synchronous>, transform_indices = @transform_5, window_bounds = array<i64: 1, 32>}, {transform_indices = @transform_6, window_bounds = array<i64: 1, 8, 32>}, {transform_indices = @transform_7, window_bounds = array<i64: 1, 1, 8, 8>}]} {
    %c0 = arith.constant 0 : index
    %c0_0 = arith.constant 0 : index
    %c0_1 = arith.constant 0 : index
    %0 = vector.load %arg2[%c0, %c0_0, %c0_1] : memref<1x8x32xf32, #tpu.memory_space<vmem>>, vector<1x8x32xf32>
    %1 = vector.shape_cast %0 : vector<1x8x32xf32> to vector<8x32xf32>
    %2 = arith.truncf %1 : vector<8x32xf32> to vector<8x32xbf16>
    %c0_2 = arith.constant 0 : index
    %c0_3 = arith.constant 0 : index
    %c0_4 = arith.constant 0 : index
    %3 = vector.load %arg3[%c0_2, %c0_3, %c0_4] : memref<1x32x8xbf16, #tpu.memory_space<vmem>>, vector<1x32x8xbf16>
    %4 = vector.shape_cast %3 : vector<1x32x8xbf16> to vector<32x8xbf16>
    %cst = arith.constant dense<0.000000e+00> : vector<8x8xf32>
    %5 = tpu.matmul %2, %4, %cst {dimension_numbers = #tpu.dot_dimension_numbers<[1], [0], [0], [1], [0, 0, 1, 1], [], []>} : vector<8x32xbf16>, vector<32x8xbf16>, vector<8x8xf32> -> vector<8x8xf32>
    %c0_5 = arith.constant 0 : index
    %c0_6 = arith.constant 0 : index
    %c0_7 = arith.constant 0 : index
    %6 = vector.load %arg4[%c0_5, %c0_6, %c0_7] : memref<1x32x8xbf16, #tpu.memory_space<vmem>>, vector<1x32x8xbf16>
    %7 = vector.shape_cast %6 : vector<1x32x8xbf16> to vector<32x8xbf16>
    %cst_8 = arith.constant dense<0.000000e+00> : vector<8x8xf32>
    %8 = tpu.matmul %2, %7, %cst_8 {dimension_numbers = #tpu.dot_dimension_numbers<[1], [0], [0], [1], [0, 0, 1, 1], [], []>} : vector<8x32xbf16>, vector<32x8xbf16>, vector<8x8xf32> -> vector<8x8xf32>
    %c0_9 = arith.constant 0 : index
    %c0_10 = arith.constant 0 : index
    %c0_11 = arith.constant 0 : index
    %9 = vector.load %arg5[%c0_9, %c0_10, %c0_11] : memref<1x32x8xbf16, #tpu.memory_space<vmem>>, vector<1x32x8xbf16>
    %10 = vector.shape_cast %9 : vector<1x32x8xbf16> to vector<32x8xbf16>
    %cst_12 = arith.constant dense<0.000000e+00> : vector<8x8xf32>
    %11 = tpu.matmul %2, %10, %cst_12 {dimension_numbers = #tpu.dot_dimension_numbers<[1], [0], [0], [1], [0, 0, 1, 1], [], []>} : vector<8x32xbf16>, vector<32x8xbf16>, vector<8x8xf32> -> vector<8x8xf32>
    %12 = arith.truncf %5 : vector<8x8xf32> to vector<8x8xbf16>
    %13 = arith.truncf %8 : vector<8x8xf32> to vector<8x8xbf16>
    %cst_13 = arith.constant dense<0.000000e+00> : vector<8x8xf32>
    %14 = tpu.matmul %12, %13, %cst_13 {dimension_numbers = #tpu.dot_dimension_numbers<[1], [1], [0], [0], [0, 0, 1, 0], [], []>} : vector<8x8xbf16>, vector<8x8xbf16>, vector<8x8xf32> -> vector<8x8xf32>
    %cst_14 = arith.constant 0.353553385 : f32
    %15 = vector.broadcast %cst_14 : f32 to vector<8x8xf32>
    %16 = arith.mulf %14, %15 : vector<8x8xf32>
    %cst_15 = arith.constant dense<0xFF800000> : vector<8xf32>
    %17 = vector.multi_reduction <maximumf>, %16, %cst_15 [1] : vector<8x8xf32> to vector<8xf32>
    %18 = vector.shape_cast %17 : vector<8xf32> to vector<8x1xf32>
    %19 = vector.broadcast %18 : vector<8x1xf32> to vector<8x8xf32>
    %20 = arith.subf %16, %19 : vector<8x8xf32>
    %21 = math.exp %20 : vector<8x8xf32>
    %cst_16 = arith.constant dense<0.000000e+00> : vector<8xf32>
    %22 = vector.multi_reduction <add>, %21, %cst_16 [1] : vector<8x8xf32> to vector<8xf32>
    %23 = vector.shape_cast %22 : vector<8xf32> to vector<8x1xf32>
    %24 = tpu.reciprocal %23 {approx = true} : vector<8x1xf32> -> vector<8x1xf32>
    %25 = vector.broadcast %24 : vector<8x1xf32> to vector<8x8xf32>
    %26 = arith.mulf %21, %25 : vector<8x8xf32>
    %c0_17 = arith.constant 0 : index
    %c0_18 = arith.constant 0 : index
    %c0_19 = arith.constant 0 : index
    %c0_20 = arith.constant 0 : index
    %27 = vector.load %arg9[%c0_17, %c0_18, %c0_19, %c0_20] : memref<1x1x8x8xf32, #tpu.memory_space<vmem>>, vector<1x1x8x8xf32>
    %28 = vector.shape_cast %27 : vector<1x1x8x8xf32> to vector<8x8xf32>
    %29 = vector.shape_cast %26 : vector<8x8xf32> to vector<1x1x8x8xf32>
    tpu.vector_store %arg9[%c0_17, %c0_18, %c0_19, %c0_20], %29 {strides = array<i32>} : memref<1x1x8x8xf32, #tpu.memory_space<vmem>>, vector<1x1x8x8xf32>,
    %30 = arith.truncf %26 : vector<8x8xf32> to vector<8x8xbf16>
    %31 = arith.truncf %11 : vector<8x8xf32> to vector<8x8xbf16>
    %cst_21 = arith.constant dense<0.000000e+00> : vector<8x8xf32>
    %32 = tpu.matmul %30, %31, %cst_21 {dimension_numbers = #tpu.dot_dimension_numbers<[1], [0], [0], [1], [0, 0, 1, 1], [], []>} : vector<8x8xbf16>, vector<8x8xbf16>, vector<8x8xf32> -> vector<8x8xf32>
    %33 = arith.truncf %32 : vector<8x8xf32> to vector<8x8xbf16>
    %c0_22 = arith.constant 0 : index
    %c0_23 = arith.constant 0 : index
    %c0_24 = arith.constant 0 : index
    %34 = vector.load %arg6[%c0_22, %c0_23, %c0_24] : memref<1x8x32xbf16, #tpu.memory_space<vmem>>, vector<1x8x32xbf16>
    %35 = vector.shape_cast %34 : vector<1x8x32xbf16> to vector<8x32xbf16>
    %cst_25 = arith.constant dense<0.000000e+00> : vector<8x32xf32>
    %36 = tpu.matmul %33, %35, %cst_25 {dimension_numbers = #tpu.dot_dimension_numbers<[1], [0], [0], [1], [0, 0, 1, 1], [], []>} : vector<8x8xbf16>, vector<8x32xbf16>, vector<8x32xf32> -> vector<8x32xf32>
    %c0_i32 = arith.constant 0 : i32
    %37 = arith.cmpi eq, %arg1, %c0_i32 : i32
    %38 = arith.extui %37 : i1 to i32
    %c0_i32_26 = arith.constant 0 : i32
    %39 = arith.cmpi ne, %38, %c0_i32_26 : i32
    scf.if %39 {
      %c0_33 = arith.constant 0 : index
      %c0_34 = arith.constant 0 : index
      %46 = vector.load %arg7[%c0_33, %c0_34] : memref<1x32xf32, #tpu.memory_space<vmem>>, vector<1x32xf32>
      %47 = vector.shape_cast %46 : vector<1x32xf32> to vector<1x32xf32>
      %48 = vector.broadcast %47 : vector<1x32xf32> to vector<8x32xf32>
      %c0_35 = arith.constant 0 : index
      %c0_36 = arith.constant 0 : index
      %c0_37 = arith.constant 0 : index
      %49 = vector.load %arg8[%c0_35, %c0_36, %c0_37] : memref<1x8x32xf32, #tpu.memory_space<vmem>>, vector<1x8x32xf32>
      %50 = vector.shape_cast %49 : vector<1x8x32xf32> to vector<8x32xf32>
      %51 = vector.shape_cast %48 : vector<8x32xf32> to vector<1x8x32xf32>
      tpu.vector_store %arg8[%c0_35, %c0_36, %c0_37], %51 {strides = array<i32>} : memref<1x8x32xf32, #tpu.memory_space<vmem>>, vector<1x8x32xf32>,
    } else {
    }
    %c0_27 = arith.constant 0 : index
    %c0_28 = arith.constant 0 : index
    %c0_29 = arith.constant 0 : index
    %40 = vector.load %arg8[%c0_27, %c0_28, %c0_29] : memref<1x8x32xf32, #tpu.memory_space<vmem>>, vector<1x8x32xf32>
    %41 = vector.shape_cast %40 : vector<1x8x32xf32> to vector<8x32xf32>
    %42 = arith.addf %41, %36 : vector<8x32xf32>
    %c0_30 = arith.constant 0 : index
    %c0_31 = arith.constant 0 : index
    %c0_32 = arith.constant 0 : index
    %43 = vector.load %arg8[%c0_30, %c0_31, %c0_32] : memref<1x8x32xf32, #tpu.memory_space<vmem>>, vector<1x8x32xf32>
    %44 = vector.shape_cast %43 : vector<1x8x32xf32> to vector<8x32xf32>
    %45 = vector.shape_cast %42 : vector<8x32xf32> to vector<1x8x32xf32>
    tpu.vector_store %arg8[%c0_30, %c0_31, %c0_32], %45 {strides = array<i32>} : memref<1x8x32xf32, #tpu.memory_space<vmem>>, vector<1x8x32xf32>,
    return
  }
  func.func @transform_0(%arg0: i32, %arg1: i32) -> (i32, i32, i32) {
    %c0_i32 = arith.constant 0 : i32
    %c0_i32_0 = arith.constant 0 : i32
    %c0_i32_1 = arith.constant 0 : i32
    return %arg0, %c0_i32, %c0_i32_0 : i32, i32, i32
  }
  func.func @transform_1(%arg0: i32, %arg1: i32) -> (i32, i32, i32) {
    %c0_i32 = arith.constant 0 : i32
    %c0_i32_0 = arith.constant 0 : i32
    %c0_i32_1 = arith.constant 0 : i32
    return %arg1, %c0_i32, %c0_i32_0 : i32, i32, i32
  }
  func.func @transform_2(%arg0: i32, %arg1: i32) -> (i32, i32, i32) {
    %c0_i32 = arith.constant 0 : i32
    %c0_i32_0 = arith.constant 0 : i32
    %c0_i32_1 = arith.constant 0 : i32
    return %arg1, %c0_i32, %c0_i32_0 : i32, i32, i32
  }
  func.func @transform_3(%arg0: i32, %arg1: i32) -> (i32, i32, i32) {
    %c0_i32 = arith.constant 0 : i32
    %c0_i32_0 = arith.constant 0 : i32
    %c0_i32_1 = arith.constant 0 : i32
    return %arg1, %c0_i32, %c0_i32_0 : i32, i32, i32
  }
  func.func @transform_4(%arg0: i32, %arg1: i32) -> (i32, i32, i32) {
    %c0_i32 = arith.constant 0 : i32
    %c0_i32_0 = arith.constant 0 : i32
    %c0_i32_1 = arith.constant 0 : i32
    return %arg1, %c0_i32, %c0_i32_0 : i32, i32, i32
  }
  func.func @transform_5(%arg0: i32, %arg1: i32) -> (i32, i32) {
    %c0_i32 = arith.constant 0 : i32
    %c0_i32_0 = arith.constant 0 : i32
    %c0_i32_1 = arith.constant 0 : i32
    return %c0_i32, %c0_i32_0 : i32, i32
  }
  func.func @transform_6(%arg0: i32, %arg1: i32) -> (i32, i32, i32) {
    %c0_i32 = arith.constant 0 : i32
    %c0_i32_0 = arith.constant 0 : i32
    %c0_i32_1 = arith.constant 0 : i32
    return %arg0, %c0_i32, %c0_i32_0 : i32, i32, i32
  }
  func.func @transform_7(%arg0: i32, %arg1: i32) -> (i32, i32, i32, i32) {
    %c0_i32 = arith.constant 0 : i32
    %c0_i32_0 = arith.constant 0 : i32
    %c0_i32_1 = arith.constant 0 : i32
    return %arg0, %arg1, %c0_i32, %c0_i32_0 : i32, i32, i32, i32
  }
}

</mosaic_0001>

<llo_original>
// kernel: tpu_custom_call.1
$region0: #{tpu_custom_call.1}
  #allocation0 [shape = 'u32[]', space=smem, size = 0x4, offset = 0x4, fixed_abs, tag = 'smem constant byte address 0x4 - core index']
  #allocation1 [shape = 'u32[144,128]{1,0:T(1,128)}', space=vmem, size = 0x12000, scoped, tag = 'internal scratch']
  %s0 = inlined_call_operand.vmem [shape: f32[2,8,32], index: 0, kind: input, shape index: {}]
  %s1 = inlined_call_operand.vmem [shape: bf16[4,32,8], index: 1, kind: input, shape index: {}]
  %s2 = inlined_call_operand.vmem [shape: bf16[4,32,8], index: 2, kind: input, shape index: {}]
  %s3 = inlined_call_operand.vmem [shape: bf16[4,32,8], index: 3, kind: input, shape index: {}]
  %s4 = inlined_call_operand.vmem [shape: bf16[4,8,32], index: 4, kind: input, shape index: {}]
  %s5 = inlined_call_operand.vmem [shape: f32[1,32], index: 5, kind: input, shape index: {}]
  %s6 = inlined_call_operand.hbm [shape: f32[2,8,32], index: 6, kind: output, shape index: {0}]
  %s7 = inlined_call_operand.hbm [shape: f32[2,4,8,8], index: 7, kind: output, shape index: {1}]
  %8 = xla_tuple %s6, %s7
  %s9 = sld [smem:[#allocation0]]
  $region69: #{tpu_custom_call.1} parent=0
    _
  %s11 = ssub.s32 1, %s9
  %s12 = scalar_select 0, %s11, %s9
  $region1: #{tpu_custom_call.1} parent=0
    #allocation2 [shape = 'u8[8192]{0}', space=vmem, size = 0x2000, scoped, tag = 'output window, operand 0']
    #allocation3 [shape = 's32[2]{0}', space=sflag, size = 0x8, scoped, tag = 'scoped memory for tpu_custom_call.1']
    #allocation4 [shape = 'u8[8192]{0}', space=vmem, size = 0x2000, scoped, tag = 'output window, operand 1']
    #allocation5 [shape = 's32[2]{0}', space=sflag, size = 0x8, scoped, tag = 'scoped memory for tpu_custom_call.1']
    %13 = vsyncpa [#allocation3], 0
    %s14 = scalar_lea.sflag [#allocation3], 1
    %15 = vsyncpa %s14, 0
    %16 = vsyncpa [#allocation5], 0
    %s17 = scalar_lea.sflag [#allocation5], 1
    %18 = vsyncpa %s17, 0
    loop: start=0, step=1, limit=10
    $region2: #{tpu_custom_call.1} parent=1 // loop_pre_header
      _
    $region3: #{tpu_custom_call.1} parent=1 // loop_header
      %s20 = sphi 0, %s24
      %p21 = scmp.ge.s32.totalorder %s20, 10
      %s27 = sphi 0, %s39
      %s28 = sphi 0, %s35
      %s29 = sphi 0, %s27
      %s30 = sphi 0, %s28
      %s31 = sphi 0, %s29
      %s32 = sphi 0, %s30
      %s42 = sphi 0, %s44
      %s45 = sphi 0, %s42
      %s46 = sphi 0, %s45
      %s62 = sphi 0, %s46
      %s68 = sphi 0, %s70
      %s71 = sphi 0, %s68
      %s72 = sphi 0, %s71
      %s88 = sphi 0, %s72
      %s94 = sphi 0, %s96
      %s97 = sphi 0, %s94
      %s98 = sphi 0, %s97
      %s114 = sphi 0, %s98
      %s120 = sphi 0, %s122
      %s123 = sphi 0, %s120
      %s124 = sphi 0, %s123
      %s140 = sphi 0, %s124
      %s146 = sphi 0, %s148
      %s149 = sphi 0, %s146
      %s150 = sphi 0, %s149
      %s166 = sphi 0, %s150
      %s170 = sphi 0, %s170
      %s172 = sphi 0, %s170
      %s173 = sphi 0, %s172
      %s187 = sphi 0, %s173
      %s193 = sphi 0, %s195
      %s196 = sphi 0, %s193
      %s197 = sphi 0, %s196
      %s213 = sphi 0, %s197
      %s221 = sphi 0, %s223
      %s224 = sphi 0, %s221
      %s225 = sphi 0, %s224
      %s241 = sphi 0, %s225
    $region4: #{tpu_custom_call.1} parent=1 // loop_header_branch
      %23 = sbr.rel (%p21) target = $region8
    $region5: #{tpu_custom_call.1} parent=1 // loop_body
      %s25 = ssub.s32 %s20, 1
      %s26 = ssub.s32 %s20, 2
      %s33 = sadd.s32 1, %s28
      %p34 = scmp.ge.s32.totalorder %s33, 4
      %s35 = scalar_select %p34, 0, %s33
      %s36 = sadd.s32 1, %s27
      %s37 = scalar_select %p34, %s36, %s27
      %p38 = scmp.ge.s32.totalorder %s37, 2
      %s39 = scalar_select %p38, 0, %s37
      %s40 = ssub.s32 %s27, %s39
      %p41 = scmp.eq.s32.totalorder %s40, 0
      %s43 = sadd.s32 %s42, 1
      %s44 = scalar_select %p41, %s42, %s43
      %p47 = pneg %p41
      %p48 = scmp.eq.s32.totalorder %s20, 7
      %p49 = por %p47, %p48
      %p50 = scmp.ne.s32.totalorder %s42, %s45
      %p51 = scmp.eq.s32.totalorder %s20, 0
      %p52 = por %p50, %p51
      %p53 = scmp.ne.s32.totalorder %s42, %s45
      %p54 = scmp.eq.s32.totalorder %s25, 7
      %p55 = por %p53, %p54
      %p56 = scmp.ne.s32.totalorder %s45, %s46
      %p57 = scmp.eq.s32.totalorder %s25, 0
      %p58 = por %p56, %p57
      %p59 = scmp.ne.s32.totalorder %s45, %s46
      %p60 = scmp.eq.s32.totalorder %s26, 7
      %p61 = por %p59, %p60
      %p63 = scmp.ne.s32.totalorder %s46, %s62
      %p64 = scmp.eq.s32.totalorder %s26, 0
      %p65 = por %p63, %p64
      %s66 = ssub.s32 %s28, %s35
      %p67 = scmp.eq.s32.totalorder %s66, 0
      %s69 = sadd.s32 %s68, 1
      %s70 = scalar_select %p67, %s68, %s69
      %p73 = pneg %p67
      %p74 = scmp.eq.s32.totalorder %s20, 7
      %p75 = por %p73, %p74
      %p76 = scmp.ne.s32.totalorder %s68, %s71
      %p77 = scmp.eq.s32.totalorder %s20, 0
      %p78 = por %p76, %p77
      %p79 = scmp.ne.s32.totalorder %s68, %s71
      %p80 = scmp.eq.s32.totalorder %s25, 7
      %p81 = por %p79, %p80
      %p82 = scmp.ne.s32.totalorder %s71, %s72
      %p83 = scmp.eq.s32.totalorder %s25, 0
      %p84 = por %p82, %p83
      %p85 = scmp.ne.s32.totalorder %s71, %s72
      %p86 = scmp.eq.s32.totalorder %s26, 7
      %p87 = por %p85, %p86
      %p89 = scmp.ne.s32.totalorder %s72, %s88
      %p90 = scmp.eq.s32.totalorder %s26, 0
      %p91 = por %p89, %p90
      %s92 = ssub.s32 %s28, %s35
      %p93 = scmp.eq.s32.totalorder %s92, 0
      %s95 = sadd.s32 %s94, 1
      %s96 = scalar_select %p93, %s94, %s95
      %p99 = pneg %p93
      %p100 = scmp.eq.s32.totalorder %s20, 7
      %p101 = por %p99, %p100
      %p102 = scmp.ne.s32.totalorder %s94, %s97
      %p103 = scmp.eq.s32.totalorder %s20, 0
      %p104 = por %p102, %p103
      %p105 = scmp.ne.s32.totalorder %s94, %s97
      %p106 = scmp.eq.s32.totalorder %s25, 7
      %p107 = por %p105, %p106
      %p108 = scmp.ne.s32.totalorder %s97, %s98
      %p109 = scmp.eq.s32.totalorder %s25, 0
      %p110 = por %p108, %p109
      %p111 = scmp.ne.s32.totalorder %s97, %s98
      %p112 = scmp.eq.s32.totalorder %s26, 7
      %p113 = por %p111, %p112
      %p115 = scmp.ne.s32.totalorder %s98, %s114
      %p116 = scmp.eq.s32.totalorder %s26, 0
      %p117 = por %p115, %p116
      %s118 = ssub.s32 %s28, %s35
      %p119 = scmp.eq.s32.totalorder %s118, 0
      %s121 = sadd.s32 %s120, 1
      %s122 = scalar_select %p119, %s120, %s121
      %p125 = pneg %p119
      %p126 = scmp.eq.s32.totalorder %s20, 7
      %p127 = por %p125, %p126
      %p128 = scmp.ne.s32.totalorder %s120, %s123
      %p129 = scmp.eq.s32.totalorder %s20, 0
      %p130 = por %p128, %p129
      %p131 = scmp.ne.s32.totalorder %s120, %s123
      %p132 = scmp.eq.s32.totalorder %s25, 7
      %p133 = por %p131, %p132
      %p134 = scmp.ne.s32.totalorder %s123, %s124
      %p135 = scmp.eq.s32.totalorder %s25, 0
      %p136 = por %p134, %p135
      %p137 = scmp.ne.s32.totalorder %s123, %s124
      %p138 = scmp.eq.s32.totalorder %s26, 7
      %p139 = por %p137, %p138
      %p141 = scmp.ne.s32.totalorder %s124, %s140
      %p142 = scmp.eq.s32.totalorder %s26, 0
      %p143 = por %p141, %p142
      %s144 = ssub.s32 %s28, %s35
      %p145 = scmp.eq.s32.totalorder %s144, 0
      %s147 = sadd.s32 %s146, 1
      %s148 = scalar_select %p145, %s146, %s147
      %p151 = pneg %p145
      %p152 = scmp.eq.s32.totalorder %s20, 7
      %p153 = por %p151, %p152
      %p154 = scmp.ne.s32.totalorder %s146, %s149
      %p155 = scmp.eq.s32.totalorder %s20, 0
      %p156 = por %p154, %p155
      %p157 = scmp.ne.s32.totalorder %s146, %s149
      %p158 = scmp.eq.s32.totalorder %s25, 7
      %p159 = por %p157, %p158
      %p160 = scmp.ne.s32.totalorder %s149, %s150
      %p161 = scmp.eq.s32.totalorder %s25, 0
      %p162 = por %p160, %p161
      %p163 = scmp.ne.s32.totalorder %s149, %s150
      %p164 = scmp.eq.s32.totalorder %s26, 7
      %p165 = por %p163, %p164
      %p167 = scmp.ne.s32.totalorder %s150, %s166
      %p168 = scmp.eq.s32.totalorder %s26, 0
      %p169 = por %p167, %p168
      %s171 = sadd.s32 %s170, 1
      %p174 = scmp.eq.s32.totalorder %s20, 7
      %p175 = scmp.ne.s32.totalorder %s170, %s172
      %p176 = scmp.eq.s32.totalorder %s20, 0
      %p177 = por %p175, %p176
      %p178 = scmp.ne.s32.totalorder %s170, %s172
      %p179 = scmp.eq.s32.totalorder %s25, 7
      %p180 = por %p178, %p179
      %p181 = scmp.ne.s32.totalorder %s172, %s173
      %p182 = scmp.eq.s32.totalorder %s25, 0
      %p183 = por %p181, %p182
      %p184 = scmp.ne.s32.totalorder %s172, %s173
      %p185 = scmp.eq.s32.totalorder %s26, 7
      %p186 = por %p184, %p185
      %p188 = scmp.ne.s32.totalorder %s173, %s187
      %p189 = scmp.eq.s32.totalorder %s26, 0
      %p190 = por %p188, %p189
      %s191 = ssub.s32 %s27, %s39
      %p192 = scmp.eq.s32.totalorder %s191, 0
      %s194 = sadd.s32 %s193, 1
      %s195 = scalar_select %p192, %s193, %s194
      %p198 = pneg %p192
      %p199 = scmp.eq.s32.totalorder %s20, 7
      %p200 = por %p198, %p199
      %p201 = scmp.ne.s32.totalorder %s193, %s196
      %p202 = scmp.eq.s32.totalorder %s20, 0
      %p203 = por %p201, %p202
      %p204 = scmp.ne.s32.totalorder %s193, %s196
      %p205 = scmp.eq.s32.totalorder %s25, 7
      %p206 = por %p204, %p205
      %p207 = scmp.ne.s32.totalorder %s196, %s197
      %p208 = scmp.eq.s32.totalorder %s25, 0
      %p209 = por %p207, %p208
      %p210 = scmp.ne.s32.totalorder %s196, %s197
      %p211 = scmp.eq.s32.totalorder %s26, 7
      %p212 = por %p210, %p211
      %p214 = scmp.ne.s32.totalorder %s197, %s213
      %p215 = scmp.eq.s32.totalorder %s26, 0
      %p216 = por %p214, %p215
      %s217 = ssub.s32 %s27, %s39
      %s218 = ssub.s32 %s28, %s35
      %s219 = sor.u32 %s217, %s218
      %p220 = scmp.eq.s32.totalorder %s219, 0
      %s222 = sadd.s32 %s221, 1
      %s223 = scalar_select %p220, %s221, %s222
      %p226 = pneg %p220
      %p227 = scmp.eq.s32.totalorder %s20, 7
      %p228 = por %p226, %p227
      %p229 = scmp.ne.s32.totalorder %s221, %s224
      %p230 = scmp.eq.s32.totalorder %s20, 0
      %p231 = por %p229, %p230
      %p232 = scmp.ne.s32.totalorder %s221, %s224
      %p233 = scmp.eq.s32.totalorder %s25, 7
      %p234 = por %p232, %p233
      %p235 = scmp.ne.s32.totalorder %s224, %s225
      %p236 = scmp.eq.s32.totalorder %s25, 0
      %p237 = por %p235, %p236
      %p238 = scmp.ne.s32.totalorder %s224, %s225
      %p239 = scmp.eq.s32.totalorder %s26, 7
      %p240 = por %p238, %p239
      %p242 = scmp.ne.s32.totalorder %s225, %s241
      %p243 = scmp.eq.s32.totalorder %s26, 0
      %p244 = por %p242, %p243
      %p245 = scmp.le.s32.totalorder 1, %s20
      %p246 = scmp.lt.s32.totalorder %s20, 9
      %p247 = pnand %p245, %p246
      %p248 = pneg %p247
      // Predicated region
      $region9: #{tpu_custom_call.1} parent=5 // pred_check
        _
      $region10: #{tpu_custom_call.1} parent=5 // pred_check_branch
        %250 = sbr.rel (%p247) target = $region12
      $region11: #{tpu_custom_call.1} parent=5 // pred_region
        %s251 = ssub.s32 %s20, 1
        // Predicated region
        $region13: #{tpu_custom_call.1} parent=11 // pred_check
          %p252 = pneg %p183
        $region14: #{tpu_custom_call.1} parent=11 // pred_check_branch
          %254 = sbr.rel (%p252) target = $region16
        $region15: #{tpu_custom_call.1} parent=11 // pred_region
          _
        $region16: #{tpu_custom_call.1} parent=11 // pred_fallthru
          _
      $region12: #{tpu_custom_call.1} parent=5 // pred_fallthru
        _
      %p255 = scmp.lt.s32.totalorder %s20, 8
      // Predicated region
      $region17: #{tpu_custom_call.1} parent=5 // pred_check
        %p256 = pneg %p255
      $region18: #{tpu_custom_call.1} parent=5 // pred_check_branch
        %258 = sbr.rel (%p256) target = $region20
      $region19: #{tpu_custom_call.1} parent=5 // pred_region
        // Predicated region
        $region21: #{tpu_custom_call.1} parent=19 // pred_check
          %p259 = pneg %p52
        $region22: #{tpu_custom_call.1} parent=19 // pred_check_branch
          %261 = sbr.rel (%p259) target = $region24
        $region23: #{tpu_custom_call.1} parent=19 // pred_region
          %p262 = scmp.lt.s32.totalorder %s27, 1
          %s263 = scalar_select %p262, %s27, 1
          %s264 = smul.addr %s263, 8
          %s265 = scalar_lea.vmem %s0, %s264
        $region24: #{tpu_custom_call.1} parent=19 // pred_fallthru
          _
        // Predicated region
        $region25: #{tpu_custom_call.1} parent=19 // pred_check
          %p266 = pneg %p78
        $region26: #{tpu_custom_call.1} parent=19 // pred_check_branch
          %268 = sbr.rel (%p266) target = $region28
        $region27: #{tpu_custom_call.1} parent=19 // pred_region
          %p269 = scmp.lt.s32.totalorder %s28, 3
          %s270 = scalar_select %p269, %s28, 3
          %s271 = smul.addr %s270, 4
          %s272 = smul.addr %s271, 4
          %s273 = scalar_lea.vmem %s1, %s272
        $region28: #{tpu_custom_call.1} parent=19 // pred_fallthru
          _
        // Predicated region
        $region29: #{tpu_custom_call.1} parent=19 // pred_check
          %p274 = pneg %p104
        $region30: #{tpu_custom_call.1} parent=19 // pred_check_branch
          %276 = sbr.rel (%p274) target = $region32
        $region31: #{tpu_custom_call.1} parent=19 // pred_region
          %p277 = scmp.lt.s32.totalorder %s28, 3
          %s278 = scalar_select %p277, %s28, 3
          %s279 = smul.addr %s278, 4
          %s280 = smul.addr %s279, 4
          %s281 = scalar_lea.vmem %s2, %s280
        $region32: #{tpu_custom_call.1} parent=19 // pred_fallthru
          _
        // Predicated region
        $region33: #{tpu_custom_call.1} parent=19 // pred_check
          %p282 = pneg %p130
        $region34: #{tpu_custom_call.1} parent=19 // pred_check_branch
          %284 = sbr.rel (%p282) target = $region36
        $region35: #{tpu_custom_call.1} parent=19 // pred_region
          %p285 = scmp.lt.s32.totalorder %s28, 3
          %s286 = scalar_select %p285, %s28, 3
          %s287 = smul.addr %s286, 4
          %s288 = smul.addr %s287, 4
          %s289 = scalar_lea.vmem %s3, %s288
        $region36: #{tpu_custom_call.1} parent=19 // pred_fallthru
          _
        // Predicated region
        $region37: #{tpu_custom_call.1} parent=19 // pred_check
          %p290 = pneg %p156
        $region38: #{tpu_custom_call.1} parent=19 // pred_check_branch
          %292 = sbr.rel (%p290) target = $region40
        $region39: #{tpu_custom_call.1} parent=19 // pred_region
          %p293 = scmp.lt.s32.totalorder %s28, 3
          %s294 = scalar_select %p293, %s28, 3
          %s295 = smul.addr %s294, 4
          %s296 = scalar_lea.vmem %s4, %s295
        $region40: #{tpu_custom_call.1} parent=19 // pred_fallthru
          _
      $region20: #{tpu_custom_call.1} parent=5 // pred_fallthru
        _
      %p297 = scmp.le.s32.totalorder 1, %s20
      %p298 = scmp.lt.s32.totalorder %s20, 9
      %p299 = pnand %p297, %p298
      %p300 = pneg %p299
      // Predicated region
      $region41: #{tpu_custom_call.1} parent=5 // pred_check
        _
      $region42: #{tpu_custom_call.1} parent=5 // pred_check_branch
        %302 = sbr.rel (%p299) target = $region44
      $region43: #{tpu_custom_call.1} parent=5 // pred_region
        %s303 = ssub.s32 %s20, 1
        %p304 = scmp.lt.s32.totalorder %s29, 1
        %s305 = scalar_select %p304, %s29, 1
        %s306 = smul.addr %s305, 8
        %s307 = scalar_lea.vmem %s0, %s306
        %p308 = pneg %p58
        %p309 = pneg %p55
        %p310 = scmp.lt.s32.totalorder %s30, 3
        %s311 = scalar_select %p310, %s30, 3
        %s312 = smul.addr %s311, 4
        %s313 = smul.addr %s312, 4
        %s314 = scalar_lea.vmem %s1, %s313
        %p315 = pneg %p84
        %p316 = pneg %p81
        %p317 = scmp.lt.s32.totalorder %s30, 3
        %s318 = scalar_select %p317, %s30, 3
        %s319 = smul.addr %s318, 4
        %s320 = smul.addr %s319, 4
        %s321 = scalar_lea.vmem %s2, %s320
        %p322 = pneg %p110
        %p323 = pneg %p107
        %p324 = scmp.lt.s32.totalorder %s30, 3
        %s325 = scalar_select %p324, %s30, 3
        %s326 = smul.addr %s325, 4
        %s327 = smul.addr %s326, 4
        %s328 = scalar_lea.vmem %s3, %s327
        %p329 = pneg %p136
        %p330 = pneg %p133
        %p331 = scmp.lt.s32.totalorder %s30, 3
        %s332 = scalar_select %p331, %s30, 3
        %s333 = smul.addr %s332, 4
        %s334 = scalar_lea.vmem %s4, %s333
        %p335 = pneg %p162
        %p336 = pneg %p159
        %p337 = pneg %p183
        %p338 = pneg %p180
        %p339 = pneg %p209
        %p340 = pneg %p206
        %s341 = sand.u32 %s196, 1
        %s342 = scalar_lea.sflag [#allocation3], %s341
        %s343 = sand.u32 %s196, 1
        %s344 = smul.addr %s343, 8
        %s345 = scalar_lea.vmem [#allocation2], %s344
        %p346 = pneg %p237
        %p347 = pneg %p234
        %s348 = sand.u32 %s224, 1
        %s349 = scalar_lea.sflag [#allocation5], %s348
        %s350 = sand.u32 %s224, 1
        %s351 = smul.addr %s350, 8
        %s352 = scalar_lea.vmem [#allocation4], %s351
        %p353 = scmp.lt.s32.totalorder %s29, 1
        %s354 = scalar_select %p353, %s29, 1
        %s355 = smul.addr %s354, 8
        %s356 = scalar_lea.vmem %s0, %s355
        %p357 = scmp.lt.s32.totalorder %s30, 3
        %s358 = scalar_select %p357, %s30, 3
        %s359 = smul.addr %s358, 4
        %s360 = smul.addr %s359, 4
        %s361 = scalar_lea.vmem %s1, %s360
        %p362 = scmp.lt.s32.totalorder %s30, 3
        %s363 = scalar_select %p362, %s30, 3
        %s364 = smul.addr %s363, 4
        %s365 = smul.addr %s364, 4
        %s366 = scalar_lea.vmem %s2, %s365
        %p367 = scmp.lt.s32.totalorder %s30, 3
        %s368 = scalar_select %p367, %s30, 3
        %s369 = smul.addr %s368, 4
        %s370 = smul.addr %s369, 4
        %s371 = scalar_lea.vmem %s3, %s370
        %p372 = scmp.lt.s32.totalorder %s30, 3
        %s373 = scalar_select %p372, %s30, 3
        %s374 = smul.addr %s373, 4
        %s375 = scalar_lea.vmem %s4, %s374
        %v377 = vld [vmem:[%s356] sm:$0xff]
        %v378 = vpack.c.bf16 %v377, %v377
        %v379 = vld [vmem:[%s361] sm:$0xf]
        %v380 = vld [vmem:[%s361 + $0x4] sm:$0xf]
        %v381 = vld [vmem:[%s361 + $0x8] sm:$0xf]
        %v382 = vld [vmem:[%s361 + $0xc] sm:$0xf]
        %v387 = vunpack.c.l.b16 %v379
        %v388 = vunpack.c.l.b16 %v380
        %v389 = vunpack.c.l.b16 %v381
        %v390 = vunpack.c.l.b16 %v382
        %v391 = vpack.c.b16 %v388, %v387
        %v392 = vpack.c.b16 %v390, %v389
        %vm395 = vcmask 261120
        %v397 = vsel %vm395, %v378, 0
        %399 = vmatprep.subr.bf16.mxu0 0
        %400 = vmatpush1.bf16.msra.mxu0 0
        %401 = vmatprep.subr.bf16.mxu0 0
        %402 = vmatpush1.bf16.msra.mxu0 0
        %403 = vmatprep.subr.bf16.mxu0 0
        %404 = vmatpush1.bf16.msra.mxu0 0
        %405 = vmatprep.subr.bf16.mxu0 0
        %406 = vmatpush1.bf16.msra.mxu0 0
        %407 = vmatprep.subr.bf16.mxu0 0
        %408 = vmatpush1.bf16.msra.mxu0 0
        %409 = vmatprep.subr.bf16.mxu0 0
        %410 = vmatpush1.bf16.msra.mxu0 0
        %411 = vmatprep.subr.bf16.mxu0 0
        %412 = vmatpush1.bf16.msra.mxu0 %v392
        %413 = vmatprep.subr.bf16.mxu0 0
        %414 = vmatpush1.bf16.msra.mxu0 %v391
        %415 = vmatprep.subr.bf16.mxu0 0
        %416 = vmatpush2.bf16.msra.mxu0 0
        %417 = vmatprep.subr.bf16.mxu0 0
        %418 = vmatpush2.bf16.msra.mxu0 0
        %419 = vmatprep.subr.bf16.mxu0 0
        %420 = vmatpush2.bf16.msra.mxu0 0
        %421 = vmatprep.subr.bf16.mxu0 0
        %422 = vmatpush2.bf16.msra.mxu0 0
        %423 = vmatprep.subr.bf16.mxu0 0
        %424 = vmatpush2.bf16.msra.mxu0 0
        %425 = vmatprep.subr.bf16.mxu0 0
        %426 = vmatpush2.bf16.msra.mxu0 0
        %427 = vmatprep.subr.bf16.mxu0 0
        %428 = vmatpush2.bf16.msra.mxu0 0
        %429 = vmatprep.subr.bf16.mxu0 0
        %430 = vmatpush2.bf16.msra.mxu0 0
        %431 = vmatprep.mubr.bf16.mxu0 0
        %432 = vmatmul.mubr.bf16.gmra.mxu0 %v397
        %v433 = vpop.f32.mrf.mxu0
        %v434 = vadd.f32 0.0, %v433
        %v435 = vpop.f32.mrf.mxu0
        %v436 = vpop.f32.mrf.mxu0
        %v437 = vpop.f32.mrf.mxu0
        %438 = vdwg.mxu0
        %v439 = vld [vmem:[%s366] sm:$0xf]
        %v440 = vld [vmem:[%s366 + $0x4] sm:$0xf]
        %v441 = vld [vmem:[%s366 + $0x8] sm:$0xf]
        %v442 = vld [vmem:[%s366 + $0xc] sm:$0xf]
        %v447 = vunpack.c.l.b16 %v439
        %v448 = vunpack.c.l.b16 %v440
        %v449 = vunpack.c.l.b16 %v441
        %v450 = vunpack.c.l.b16 %v442
        %v451 = vpack.c.b16 %v448, %v447
        %v452 = vpack.c.b16 %v450, %v449
        %455 = vmatprep.subr.bf16.mxu0 0
        %456 = vmatpush1.bf16.msra.mxu0 0
        %457 = vmatprep.subr.bf16.mxu0 0
        %458 = vmatpush1.bf16.msra.mxu0 0
        %459 = vmatprep.subr.bf16.mxu0 0
        %460 = vmatpush1.bf16.msra.mxu0 0
        %461 = vmatprep.subr.bf16.mxu0 0
        %462 = vmatpush1.bf16.msra.mxu0 0
        %463 = vmatprep.subr.bf16.mxu0 0
        %464 = vmatpush1.bf16.msra.mxu0 0
        %465 = vmatprep.subr.bf16.mxu0 0
        %466 = vmatpush1.bf16.msra.mxu0 0
        %467 = vmatprep.subr.bf16.mxu0 0
        %468 = vmatpush1.bf16.msra.mxu0 %v452
        %469 = vmatprep.subr.bf16.mxu0 0
        %470 = vmatpush1.bf16.msra.mxu0 %v451
        %471 = vmatprep.subr.bf16.mxu0 0
        %472 = vmatpush2.bf16.msra.mxu0 0
        %473 = vmatprep.subr.bf16.mxu0 0
        %474 = vmatpush2.bf16.msra.mxu0 0
        %475 = vmatprep.subr.bf16.mxu0 0
        %476 = vmatpush2.bf16.msra.mxu0 0
        %477 = vmatprep.subr.bf16.mxu0 0
        %478 = vmatpush2.bf16.msra.mxu0 0
        %479 = vmatprep.subr.bf16.mxu0 0
        %480 = vmatpush2.bf16.msra.mxu0 0
        %481 = vmatprep.subr.bf16.mxu0 0
        %482 = vmatpush2.bf16.msra.mxu0 0
        %483 = vmatprep.subr.bf16.mxu0 0
        %484 = vmatpush2.bf16.msra.mxu0 0
        %485 = vmatprep.subr.bf16.mxu0 0
        %486 = vmatpush2.bf16.msra.mxu0 0
        %487 = vmatprep.mubr.bf16.mxu0 0
        %488 = vmatmul.mubr.bf16.gmra.mxu0 %v397
        %v489 = vpop.f32.mrf.mxu0
        %v490 = vadd.f32 0.0, %v489
        %v491 = vpop.f32.mrf.mxu0
        %v492 = vpop.f32.mrf.mxu0
        %v493 = vpop.f32.mrf.mxu0
        %494 = vdwg.mxu0
        %v495 = vld [vmem:[%s371] sm:$0xf]
        %v496 = vld [vmem:[%s371 + $0x4] sm:$0xf]
        %v497 = vld [vmem:[%s371 + $0x8] sm:$0xf]
        %v498 = vld [vmem:[%s371 + $0xc] sm:$0xf]
        %v503 = vunpack.c.l.b16 %v495
        %v504 = vunpack.c.l.b16 %v496
        %v505 = vunpack.c.l.b16 %v497
        %v506 = vunpack.c.l.b16 %v498
        %v507 = vpack.c.b16 %v504, %v503
        %v508 = vpack.c.b16 %v506, %v505
        %511 = vmatprep.subr.bf16.mxu0 0
        %512 = vmatpush1.bf16.msra.mxu0 0
        %513 = vmatprep.subr.bf16.mxu0 0
        %514 = vmatpush1.bf16.msra.mxu0 0
        %515 = vmatprep.subr.bf16.mxu0 0
        %516 = vmatpush1.bf16.msra.mxu0 0
        %517 = vmatprep.subr.bf16.mxu0 0
        %518 = vmatpush1.bf16.msra.mxu0 0
        %519 = vmatprep.subr.bf16.mxu0 0
        %520 = vmatpush1.bf16.msra.mxu0 0
        %521 = vmatprep.subr.bf16.mxu0 0
        %522 = vmatpush1.bf16.msra.mxu0 0
        %523 = vmatprep.subr.bf16.mxu0 0
        %524 = vmatpush1.bf16.msra.mxu0 %v508
        %525 = vmatprep.subr.bf16.mxu0 0
        %526 = vmatpush1.bf16.msra.mxu0 %v507
        %527 = vmatprep.subr.bf16.mxu0 0
        %528 = vmatpush2.bf16.msra.mxu0 0
        %529 = vmatprep.subr.bf16.mxu0 0
        %530 = vmatpush2.bf16.msra.mxu0 0
        %531 = vmatprep.subr.bf16.mxu0 0
        %532 = vmatpush2.bf16.msra.mxu0 0
        %533 = vmatprep.subr.bf16.mxu0 0
        %534 = vmatpush2.bf16.msra.mxu0 0
        %535 = vmatprep.subr.bf16.mxu0 0
        %536 = vmatpush2.bf16.msra.mxu0 0
        %537 = vmatprep.subr.bf16.mxu0 0
        %538 = vmatpush2.bf16.msra.mxu0 0
        %539 = vmatprep.subr.bf16.mxu0 0
        %540 = vmatpush2.bf16.msra.mxu0 0
        %541 = vmatprep.subr.bf16.mxu0 0
        %542 = vmatpush2.bf16.msra.mxu0 0
        %543 = vmatprep.mubr.bf16.mxu0 0
        %544 = vmatmul.mubr.bf16.gmra.mxu0 %v397
        %v545 = vpop.f32.mrf.mxu0
        %v546 = vadd.f32 0.0, %v545
        %v547 = vpop.f32.mrf.mxu0
        %v548 = vpop.f32.mrf.mxu0
        %v549 = vpop.f32.mrf.mxu0
        %550 = vdwg.mxu0
        %v551 = vpack.c.bf16 %v434, %v434
        %v552 = vpack.c.bf16 %v490, %v490
        %vm553 = vcmask 64512
        %v555 = vsel %vm553, %v551, 0
        %v558 = vsel %vm553, %v552, 0
        %560 = vmatprep.subr.bf16.mxu0 0
        %561 = vmatpush1.bf16.xpose.msra.mxu0 0
        %562 = vmatprep.subr.bf16.mxu0 0
        %563 = vmatpush1.bf16.xpose.msra.mxu0 0
        %564 = vmatprep.subr.bf16.mxu0 0
        %565 = vmatpush1.bf16.xpose.msra.mxu0 0
        %566 = vmatprep.subr.bf16.mxu0 0
        %567 = vmatpush1.bf16.xpose.msra.mxu0 0
        %568 = vmatprep.subr.bf16.mxu0 0
        %569 = vmatpush1.bf16.xpose.msra.mxu0 0
        %570 = vmatprep.subr.bf16.mxu0 0
        %571 = vmatpush1.bf16.xpose.msra.mxu0 0
        %572 = vmatprep.subr.bf16.mxu0 0
        %573 = vmatpush1.bf16.xpose.msra.mxu0 0
        %574 = vmatprep.subr.bf16.mxu0 0
        %575 = vmatpush1.bf16.xpose.msra.mxu0 %v558
        %576 = vmatprep.subr.bf16.mxu0 0
        %577 = vmatpush2.bf16.xpose.msra.mxu0 0
        %578 = vmatprep.subr.bf16.mxu0 0
        %579 = vmatpush2.bf16.xpose.msra.mxu0 0
        %580 = vmatprep.subr.bf16.mxu0 0
        %581 = vmatpush2.bf16.xpose.msra.mxu0 0
        %582 = vmatprep.subr.bf16.mxu0 0
        %583 = vmatpush2.bf16.xpose.msra.mxu0 0
        %584 = vmatprep.subr.bf16.mxu0 0
        %585 = vmatpush2.bf16.xpose.msra.mxu0 0
        %586 = vmatprep.subr.bf16.mxu0 0
        %587 = vmatpush2.bf16.xpose.msra.mxu0 0
        %588 = vmatprep.subr.bf16.mxu0 0
        %589 = vmatpush2.bf16.xpose.msra.mxu0 0
        %590 = vmatprep.subr.bf16.mxu0 0
        %591 = vmatpush2.bf16.xpose.msra.mxu0 0
        %592 = vmatprep.mubr.bf16.mxu0 0
        %593 = vmatmul.mubr.bf16.gmra.mxu0 %v555
        %v594 = vpop.f32.mrf.mxu0
        %v595 = vadd.f32 0.0, %v594
        %v596 = vpop.f32.mrf.mxu0
        %v597 = vpop.f32.mrf.mxu0
        %v598 = vpop.f32.mrf.mxu0
        %599 = vdwg.mxu0
        %v600 = vmul.f32 %v595, 0.35355338
        %v601 = vsel %vm553, %v600, -inf
        %602 = vmax.xlane.f32.xlu0 %v601
        %v603 = vpop.xlane.xlu0 %602
        %v604 = vsub.f32 %v600, %v603
        %v605 = vmul.f32 %v604, 1.442695
        %v606 = vpow.pop %v605
        %v607 = vsel %vm553, %v606, 0.0
        %608 = vadd.xlane.f32.xlu0 %v607
        %v609 = vpop.xlane.xlu0 %608
        %v610 = vrcp.pop %v609
        %v611 = vmul.f32 %v606, %v610
        %612 = vst.msk [vmem:[%s352] sm:$0xff] %vm553, %v611
        %v613 = vpack.c.bf16 %v611, %v611
        %v614 = vpack.c.bf16 %v546, %v546
        %v616 = vsel %vm553, %v613, 0
        %vm618 = vcmask 1043456
        %v620 = vsel %vm618, %v614, 0
        %622 = vmatprep.subr.bf16.mxu0 0
        %623 = vmatpush1.bf16.msra.mxu0 0
        %624 = vmatprep.subr.bf16.mxu0 0
        %625 = vmatpush1.bf16.msra.mxu0 0
        %626 = vmatprep.subr.bf16.mxu0 0
        %627 = vmatpush1.bf16.msra.mxu0 0
        %628 = vmatprep.subr.bf16.mxu0 0
        %629 = vmatpush1.bf16.msra.mxu0 0
        %630 = vmatprep.subr.bf16.mxu0 0
        %631 = vmatpush1.bf16.msra.mxu0 0
        %632 = vmatprep.subr.bf16.mxu0 0
        %633 = vmatpush1.bf16.msra.mxu0 0
        %634 = vmatprep.subr.bf16.mxu0 0
        %635 = vmatpush1.bf16.msra.mxu0 0
        %636 = vmatprep.subr.bf16.mxu0 0
        %637 = vmatpush1.bf16.msra.mxu0 %v620
        %638 = vmatprep.subr.bf16.mxu0 0
        %639 = vmatpush2.bf16.msra.mxu0 0
        %640 = vmatprep.subr.bf16.mxu0 0
        %641 = vmatpush2.bf16.msra.mxu0 0
        %642 = vmatprep.subr.bf16.mxu0 0
        %643 = vmatpush2.bf16.msra.mxu0 0
        %644 = vmatprep.subr.bf16.mxu0 0
        %645 = vmatpush2.bf16.msra.mxu0 0
        %646 = vmatprep.subr.bf16.mxu0 0
        %647 = vmatpush2.bf16.msra.mxu0 0
        %648 = vmatprep.subr.bf16.mxu0 0
        %649 = vmatpush2.bf16.msra.mxu0 0
        %650 = vmatprep.subr.bf16.mxu0 0
        %651 = vmatpush2.bf16.msra.mxu0 0
        %652 = vmatprep.subr.bf16.mxu0 0
        %653 = vmatpush2.bf16.msra.mxu0 0
        %654 = vmatprep.mubr.bf16.mxu0 0
        %655 = vmatmul.mubr.bf16.gmra.mxu0 %v616
        %v656 = vpop.f32.mrf.mxu0
        %v657 = vadd.f32 0.0, %v656
        %v658 = vpop.f32.mrf.mxu0
        %v659 = vpop.f32.mrf.mxu0
        %v660 = vpop.f32.mrf.mxu0
        %661 = vdwg.mxu0
        %v662 = vpack.c.bf16 %v657, %v657
        %v663 = vld [vmem:[%s375] sm:$0xf]
        %v665 = vsel %vm553, %v662, 0
        %v668 = vsel %vm618, %v663, 0
        %670 = vmatprep.subr.bf16.mxu0 0
        %671 = vmatpush1.bf16.msra.mxu0 0
        %672 = vmatprep.subr.bf16.mxu0 0
        %673 = vmatpush1.bf16.msra.mxu0 0
        %674 = vmatprep.subr.bf16.mxu0 0
        %675 = vmatpush1.bf16.msra.mxu0 0
        %676 = vmatprep.subr.bf16.mxu0 0
        %677 = vmatpush1.bf16.msra.mxu0 0
        %678 = vmatprep.subr.bf16.mxu0 0
        %679 = vmatpush1.bf16.msra.mxu0 0
        %680 = vmatprep.subr.bf16.mxu0 0
        %681 = vmatpush1.bf16.msra.mxu0 0
        %682 = vmatprep.subr.bf16.mxu0 0
        %683 = vmatpush1.bf16.msra.mxu0 0
        %684 = vmatprep.subr.bf16.mxu0 0
        %685 = vmatpush1.bf16.msra.mxu0 %v668
        %686 = vmatprep.subr.bf16.mxu0 0
        %687 = vmatpush2.bf16.msra.mxu0 0
        %688 = vmatprep.subr.bf16.mxu0 0
        %689 = vmatpush2.bf16.msra.mxu0 0
        %690 = vmatprep.subr.bf16.mxu0 0
        %691 = vmatpush2.bf16.msra.mxu0 0
        %692 = vmatprep.subr.bf16.mxu0 0
        %693 = vmatpush2.bf16.msra.mxu0 0
        %694 = vmatprep.subr.bf16.mxu0 0
        %695 = vmatpush2.bf16.msra.mxu0 0
        %696 = vmatprep.subr.bf16.mxu0 0
        %697 = vmatpush2.bf16.msra.mxu0 0
        %698 = vmatprep.subr.bf16.mxu0 0
        %699 = vmatpush2.bf16.msra.mxu0 0
        %700 = vmatprep.subr.bf16.mxu0 0
        %701 = vmatpush2.bf16.msra.mxu0 0
        %702 = vmatprep.mubr.bf16.mxu0 0
        %703 = vmatmul.mubr.bf16.gmra.mxu0 %v665
        %v704 = vpop.f32.mrf.mxu0
        %v705 = vadd.f32 0.0, %v704
        %v706 = vpop.f32.mrf.mxu0
        %v707 = vpop.f32.mrf.mxu0
        %v708 = vpop.f32.mrf.mxu0
        %709 = vdwg.mxu0
        %p710 = scmp.eq.s32.totalorder %s30, 0
        // Predicated region
        $region45: #{tpu_custom_call.1} parent=43 // pred_check
          %p711 = pneg %p710
        $region46: #{tpu_custom_call.1} parent=43 // pred_check_branch
          %713 = sbr.rel (%p711) target = $region48
        $region47: #{tpu_custom_call.1} parent=43 // pred_region
          %v714 = vld [vmem:[%s5] sm:$0x1]
          %v716 = vlaneseq
          %v717 = vshrl.u32 %v716, 7
          %v718 = vsub.s32 0, %v717
          %v719 = vrot.slane %v714, %v718
          %721 = vst.msk [vmem:[%s345] sm:$0xff] %vm395, %v719
        $region48: #{tpu_custom_call.1} parent=43 // pred_fallthru
          _
        %v722 = vld [vmem:[%s345] sm:$0xff]
        %v723 = vadd.f32 %v722, %v705
        %724 = vst.msk [vmem:[%s345] sm:$0xff] %vm395, %v723
        %s725 = sand.u32 %s196, 1
        %s726 = scalar_lea.sflag [#allocation3], %s725
        %s727 = sand.u32 %s196, 1
        %s728 = smul.addr %s727, 8
        %s729 = scalar_lea.vmem [#allocation2], %s728
        %s730 = sand.u32 %s224, 1
        %s731 = scalar_lea.sflag [#allocation5], %s730
        %s732 = sand.u32 %s224, 1
        %s733 = smul.addr %s732, 8
        %s734 = scalar_lea.vmem [#allocation4], %s733
        // Predicated region
        $region49: #{tpu_custom_call.1} parent=43 // pred_check
          %p735 = pneg %p206
        $region50: #{tpu_custom_call.1} parent=43 // pred_check_branch
          %737 = sbr.rel (%p735) target = $region52
        $region51: #{tpu_custom_call.1} parent=43 // pred_region
          %s739 = ssub.s32 128, 128
          %740 = vsyncadd %s726, %s739
          %s741 = smul.addr %s29, 128
          %s742 = scalar_lea.hbm %s6, %s741
          %s744 = sshll.u32 %s729, 4
          %s745 = int_to_ptr.vmem [resolvable:$true] %s744
          %747 = dma.vmem_to_hbm [thread:$0]  %s745, 128, %s742, %s726
        $region52: #{tpu_custom_call.1} parent=43 // pred_fallthru
          _
        // Predicated region
        $region53: #{tpu_custom_call.1} parent=43 // pred_check
          %p748 = pneg %p234
        $region54: #{tpu_custom_call.1} parent=43 // pred_check_branch
          %750 = sbr.rel (%p748) target = $region56
        $region55: #{tpu_custom_call.1} parent=43 // pred_region
          %s752 = ssub.s32 128, 128
          %753 = vsyncadd %s731, %s752
          %s754 = smul.addr %s29, 4
          %s755 = sadd.s32 %s30, %s754
          %s756 = smul.addr %s755, 128
          %s757 = scalar_lea.hbm %s7, %s756
          %s759 = sshll.u32 %s734, 4
          %s760 = int_to_ptr.vmem [resolvable:$true] %s759
          %762 = dma.vmem_to_hbm [thread:$0]  %s760, 128, %s757, %s731
        $region56: #{tpu_custom_call.1} parent=43 // pred_fallthru
          _
      $region44: #{tpu_custom_call.1} parent=5 // pred_fallthru
        _
      %p763 = scmp.le.s32.totalorder 2, %s20
      // Predicated region
      $region57: #{tpu_custom_call.1} parent=5 // pred_check
        %p764 = pneg %p763
      $region58: #{tpu_custom_call.1} parent=5 // pred_check_branch
        %766 = sbr.rel (%p764) target = $region60
      $region59: #{tpu_custom_call.1} parent=5 // pred_region
        %s767 = ssub.s32 %s20, 2
        // Predicated region
        $region61: #{tpu_custom_call.1} parent=59 // pred_check
          %p768 = pneg %p212
        $region62: #{tpu_custom_call.1} parent=59 // pred_check_branch
          %770 = sbr.rel (%p768) target = $region64
        $region63: #{tpu_custom_call.1} parent=59 // pred_region
          %s771 = sand.u32 %s197, 1
          %s772 = scalar_lea.sflag [#allocation3], %s771
          %s773 = sand.u32 %s197, 1
          %s774 = smul.addr %s773, 8
          %s775 = scalar_lea.vmem [#allocation2], %s774
          %776 = dma.done %s772, 128
        $region64: #{tpu_custom_call.1} parent=59 // pred_fallthru
          _
        // Predicated region
        $region65: #{tpu_custom_call.1} parent=59 // pred_check
          %p777 = pneg %p240
        $region66: #{tpu_custom_call.1} parent=59 // pred_check_branch
          %779 = sbr.rel (%p777) target = $region68
        $region67: #{tpu_custom_call.1} parent=59 // pred_region
          %s780 = sand.u32 %s225, 1
          %s781 = scalar_lea.sflag [#allocation5], %s780
          %s782 = sand.u32 %s225, 1
          %s783 = smul.addr %s782, 8
          %s784 = scalar_lea.vmem [#allocation4], %s783
          %785 = dma.done %s781, 128
        $region68: #{tpu_custom_call.1} parent=59 // pred_fallthru
          _
      $region60: #{tpu_custom_call.1} parent=5 // pred_fallthru
        _
    $region6: #{tpu_custom_call.1} parent=1 // loop_footer
      %s24 = sadd.s32 1, %s20
    $region7: #{tpu_custom_call.1} parent=1 // loop_footer_branch
      %19 = sbr.rel target = $region3
    $region8: #{tpu_custom_call.1} parent=1 // loop_exit
      _
    %786 = vsyncpa [#allocation3], 1
    %s787 = scalar_lea.sflag [#allocation3], 1
    %788 = vsyncpa %s787, 1
    %789 = vsyncpa [#allocation5], 1
    %s790 = scalar_lea.sflag [#allocation5], 1
    %791 = vsyncpa %s790, 1

</llo_original>
